<compile_context>
chip_gen: v5e
topology: v5e:2x2
jax: 0.10.0
libtpu: 0.0.40
codegen_flags: <defaults>
</compile_context>

<pallas_src>
import jax
import jax.numpy as jnp
from jax.experimental import pallas as pl
from jax.experimental.pallas import tpu as pltpu


def icgn_kernel(x_ref, w0tp_ref, b0r_ref, pts_ref, gblk_ref, w0s_ref, o_ref):
    x = x_ref[...]          # (TB, D)   batch tile
    w0tp = w0tp_ref[...]    # (D, HP)   W0^T tiled P times along lanes (resident)
    b0r = b0r_ref[...]      # (1, HP)   b0 tiled P times (resident)
    pts = pts_ref[...]      # (NP, HP)  quadrature pts, P per lane row (resident)
    gblk = gblk_ref[...]    # (HP, HP)  kron(I_P, W1^T W1) (resident)
    w0s = w0s_ref[...]      # (HP, D)   tile(W0, (P,1)) / N (resident)

    tb = x.shape[0]
    npack = pts.shape[0]
    hp = w0tp.shape[1]

    # N-independent projection, already lane-tiled:
    #   z_n = pts_n * x  =>  W0 z_n = pts_n * (W0 x);   v = x  =>  W0 v = W0 x.
    u0 = jnp.dot(x, w0tp, preferred_element_type=jnp.float32)        # (TB, HP)

    # Materialize the u0 broadcast exactly once (reused below).
    u0b = jnp.broadcast_to(u0[:, None, :], (tb, npack, hp))          # (TB, NP, HP)

    # P quadrature points packed per 128-lane row -> lane-dense VPU/EUP slab.
    h = u0b * pts[None, :, :] + b0r[None, :, :]                      # (TB, NP, HP)
    s = jax.nn.sigmoid(h)
    d = s * (1.0 - s)                                                # sigmoid'

    # Single lane-dense MXU contraction against block-diagonal W1^T W1.
    a = (d * u0b).reshape(tb * npack, hp)                            # free reshape
    m = jnp.dot(a, gblk, preferred_element_type=jnp.float32)         # (TB*NP, HP)
    t = d * m.reshape(tb, npack, hp)                                 # (TB, NP, HP)

    # Quadrature sum over packed groups; the per-lane-group sum and the 1/N
    # scale ride the final (linear) matmul via the stacked W0.
    t_sum = jnp.sum(t, axis=1)                                       # (TB, HP)
    y = jnp.dot(t_sum, w0s, preferred_element_type=jnp.float32)      # (TB, D)

    # Lane-dense transposed store; wrapper transposes the (D, B) result back.
    o_ref[...] = y.T


def icgn_forward(x, pts, w0, b0, w1, *, block_b=512):
    """x: (B, D), pts: (N,), w0: (H, D), b0: (H,), w1: (H, H) -> (B, D)."""
    B, D = x.shape
    H = w0.shape[0]
    N = pts.shape[0]

    # ---- lane-packing factor: P quadrature points per (<=128)-lane row -------
    p_max = max(1, 128 // H)
    P = 1
    for cand in range(min(p_max, N), 0, -1):
        if N % cand == 0:
            P = cand
            break
    HP = P * H
    NP = N // P

    # ---- wrapper-side algebraic precompute (tiny, exact restructurings) ------
    w0t = jnp.transpose(w0)                                  # (D, H)
    w0tp = jnp.tile(w0t, (1, P))                             # (D, HP)
    b0r = jnp.tile(b0.reshape(1, H), (1, P))                 # (1, HP)
    g = jnp.dot(jnp.transpose(w1), w1)                       # (H, H) = W1^T W1
    gblk = jnp.kron(jnp.eye(P, dtype=g.dtype), g)            # (HP, HP)
    pts_rep = jnp.repeat(pts.reshape(NP, P), H, axis=1)      # (NP, HP)
    w0s = jnp.tile(w0, (P, 1)) * (1.0 / N)                   # (HP, D), absorbs 1/N

    # ---- batch tiling: big tiles, >=2 tiles for large B (v7x megacore) -------
    b8 = ((B + 7) // 8) * 8
    if b8 <= 256:
        tb = b8                                              # single full-dim tile
    else:
        blocks = pl.cdiv(b8, 128)
        tb_blocks = max(1, min(block_b // 128, blocks // 2))  # keep >= 2 tiles
        tb = 128 * tb_blocks                                  # lane-dense out tiles
    grid_b = pl.cdiv(b8, tb)
    b_pad = grid_b * tb

    if b_pad != B:
        # Zero rows contribute exactly zero and are sliced off afterwards.
        # TODO(synk): at production B, mask the ragged last tile in-kernel
        # instead of this O(B*D) wrapper-side pad copy.
        x_in = jnp.zeros((b_pad, D), x.dtype).at[:B].set(x)
    else:
        x_in = x

    # Advisory cost estimate so XLA schedules around this cheap custom call.
    flops = 2 * b_pad * (D * HP + NP * HP * HP + HP * D) + 8 * b_pad * NP * HP
    bytes_accessed = 4 * (2 * b_pad * D + D * HP + HP + NP * HP + HP * HP + HP * D)
    cost = pl.CostEstimate(flops=flops, transcendentals=b_pad * NP * HP,
                           bytes_accessed=bytes_accessed)

    # Explicit scoped-VMEM limit (v5e default is only 16 MiB; safe on v6e/v7x).
    slab_bytes = 4 * tb * NP * HP
    vmem_limit = int(min(48 * 2**20, max(32 * 2**20, 16 * slab_bytes)))

    out_t = pl.pallas_call(
        icgn_kernel,
        out_shape=jax.ShapeDtypeStruct((D, b_pad), jnp.float32),
        grid_spec=pltpu.PrefetchScalarGridSpec(
            num_scalar_prefetch=0,
            grid=(grid_b,),
            in_specs=[
                pl.BlockSpec((tb, D), lambda i: (i, 0)),     # x: tiled over batch
                pl.BlockSpec((D, HP), lambda i: (0, 0)),     # W0^T (lane-tiled)
                pl.BlockSpec((1, HP), lambda i: (0, 0)),     # b0  (lane-tiled)
                pl.BlockSpec((NP, HP), lambda i: (0, 0)),    # pts (lane-packed)
                pl.BlockSpec((HP, HP), lambda i: (0, 0)),    # kron(I_P, W1^T W1)
                pl.BlockSpec((HP, D), lambda i: (0, 0)),     # stacked W0 / N
            ],
            out_specs=pl.BlockSpec((D, tb), lambda i: (0, i)),  # lane-dense store
        ),
        compiler_params=pltpu.CompilerParams(
            dimension_semantics=("parallel",),               # megacore over batch
            vmem_limit_bytes=vmem_limit,
        ),
        cost_estimate=cost,
    )(x_in, w0tp, b0r, pts_rep, gblk, w0s)

    return jnp.transpose(out_t)[:B]


# ---------------- pure-JAX reference (autodiff, mirrors the torch module) ----
def _forward_lin(params, x):
    w0, b0, w1, b1 = params
    return jax.nn.sigmoid(x @ w0.T + b0) @ w1.T + b1


def icgn_reference(x, pts, params):
    B, D = x.shape
    N = pts.shape[0]
    z = (x[:, None, :] * pts[None, :, None]).reshape(B * N, D)
    v = jnp.broadcast_to(x[:, None, :], (B, N, D)).reshape(B * N, D)
    f = lambda inp: _forward_lin(params, inp)
    _, jv = jax.jvp(f, (z,), (v,))
    _, vjp_fn = jax.vjp(f, z)
    (y,) = vjp_fn(jv)
    return y.reshape(B, N, D).sum(axis=1) / N


if __name__ == "__main__":
    input_dim, hidden_dim = 8, 32
    batch, n_pts = 16, 16

    key = jax.random.PRNGKey(0)
    kx, kp, k0, kb0, k1, kb1, kx2 = jax.random.split(key, 7)

    # Deterministic parameter init (matches nn.Linear shapes; uniform fan-in scale).
    lim0 = 1.0 / jnp.sqrt(input_dim)
    lim1 = 1.0 / jnp.sqrt(hidden_dim)
    w0 = jax.random.uniform(k0, (hidden_dim, input_dim), jnp.float32, -lim0, lim0)
    b0 = jax.random.uniform(kb0, (hidden_dim,), jnp.float32, -lim0, lim0)
    w1 = jax.random.uniform(k1, (hidden_dim, hidden_dim), jnp.float32, -lim1, lim1)
    b1 = jax.random.uniform(kb1, (hidden_dim,), jnp.float32, -lim1, lim1)  # drops out of J^T J v

    x = jax.random.uniform(kx, (batch, input_dim), jnp.float32)
    pts = jax.random.uniform(kp, (n_pts,), jnp.float32)  # torch.rand quadrature points
    params = (w0, b0, w1, b1)

    # Small batch: single tile (tb=16, grid=(1,)), lane-packed quadrature (P=4).
    out = jax.block_until_ready(icgn_forward(x, pts, w0, b0, w1))
    ref = icgn_reference(x, pts, params)
    assert out.shape == (batch, input_dim)
    assert jnp.allclose(out, ref, atol=1e-5, rtol=1e-5), (out, ref)

    # Ragged tiny batch: exercises the zero-row pad (B=2 -> tb=8, grid=(1,)).
    out2 = jax.block_until_ready(icgn_forward(x[:2], pts, w0, b0, w1))
    assert out2.shape == (2, input_dim)
    assert jnp.allclose(out2, ref[:2], atol=1e-5, rtol=1e-5), (out2, ref[:2])

    # Multi-tile path: B=300 -> 128-row lane-dense tiles, grid=(3,) on the
    # "parallel" axis, padded ragged tail, tiled lane-dense (D, tb) stores.
    x_big = jax.random.uniform(kx2, (300, input_dim), jnp.float32)
    out_big = jax.block_until_ready(icgn_forward(x_big, pts, w0, b0, w1))
    ref_big = icgn_reference(x_big, pts, params)
    assert out_big.shape == (300, input_dim)
    assert jnp.allclose(out_big, ref_big, atol=1e-5, rtol=1e-5), (out_big, ref_big)

    print("KERNEL_OK")
</pallas_src>

<mosaic_0001>
module attributes {stable_mosaic.version = 11 : i64} {
  func.func @icgn_kernel(%arg0: i32, %arg1: memref<16x8xf32, #tpu.memory_space<vmem>>, %arg2: memref<8x128xf32, #tpu.memory_space<vmem>>, %arg3: memref<1x128xf32, #tpu.memory_space<vmem>>, %arg4: memref<4x128xf32, #tpu.memory_space<vmem>>, %arg5: memref<128x128xf32, #tpu.memory_space<vmem>>, %arg6: memref<128x8xf32, #tpu.memory_space<vmem>>, %arg7: memref<8x16xf32, #tpu.memory_space<vmem>>) attributes {dimension_semantics = [#tpu.dimension_semantics<parallel>], iteration_bounds = array<i64: 1>, scalar_prefetch = 0 : i64, scratch_operands = 0 : i64, tpu.core_type = #tpu.core_type<tc>, window_params = [{transform_indices = @transform_0, window_bounds = array<i64: 16, 8>}, {pipeline_mode = #tpu.pipeline_mode<synchronous>, transform_indices = @transform_1, window_bounds = array<i64: 8, 128>}, {pipeline_mode = #tpu.pipeline_mode<synchronous>, transform_indices = @transform_2, window_bounds = array<i64: 1, 128>}, {pipeline_mode = #tpu.pipeline_mode<synchronous>, transform_indices = @transform_3, window_bounds = array<i64: 4, 128>}, {pipeline_mode = #tpu.pipeline_mode<synchronous>, transform_indices = @transform_4, window_bounds = array<i64: 128, 128>}, {pipeline_mode = #tpu.pipeline_mode<synchronous>, transform_indices = @transform_5, window_bounds = array<i64: 128, 8>}, {transform_indices = @transform_6, window_bounds = array<i64: 8, 16>}]} {
    %c0 = arith.constant 0 : index
    %c0_0 = arith.constant 0 : index
    %0 = vector.load %arg1[%c0, %c0_0] : memref<16x8xf32, #tpu.memory_space<vmem>>, vector<16x8xf32>
    %c0_1 = arith.constant 0 : index
    %c0_2 = arith.constant 0 : index
    %1 = vector.load %arg2[%c0_1, %c0_2] : memref<8x128xf32, #tpu.memory_space<vmem>>, vector<8x128xf32>
    %c0_3 = arith.constant 0 : index
    %c0_4 = arith.constant 0 : index
    %2 = vector.load %arg3[%c0_3, %c0_4] : memref<1x128xf32, #tpu.memory_space<vmem>>, vector<1x128xf32>
    %c0_5 = arith.constant 0 : index
    %c0_6 = arith.constant 0 : index
    %3 = vector.load %arg4[%c0_5, %c0_6] : memref<4x128xf32, #tpu.memory_space<vmem>>, vector<4x128xf32>
    %c0_7 = arith.constant 0 : index
    %c0_8 = arith.constant 0 : index
    %4 = vector.load %arg5[%c0_7, %c0_8] : memref<128x128xf32, #tpu.memory_space<vmem>>, vector<128x128xf32>
    %c0_9 = arith.constant 0 : index
    %c0_10 = arith.constant 0 : index
    %5 = vector.load %arg6[%c0_9, %c0_10] : memref<128x8xf32, #tpu.memory_space<vmem>>, vector<128x8xf32>
    %cst = arith.constant dense<0.000000e+00> : vector<16x128xf32>
    %6 = tpu.matmul %0, %1, %cst {dimension_numbers = #tpu.dot_dimension_numbers<[1], [0], [0], [1], [0, 0, 1, 1], [], []>} : vector<16x8xf32>, vector<8x128xf32>, vector<16x128xf32> -> vector<16x128xf32>
    %7 = vector.shape_cast %6 : vector<16x128xf32> to vector<16x1x128xf32>
    %8 = vector.shape_cast %7 : vector<16x1x128xf32> to vector<16x1x128xf32>
    %9 = vector.broadcast %8 : vector<16x1x128xf32> to vector<16x4x128xf32>
    %10 = vector.shape_cast %3 : vector<4x128xf32> to vector<1x4x128xf32>
    %11 = vector.broadcast %10 : vector<1x4x128xf32> to vector<16x4x128xf32>
    %12 = arith.mulf %9, %11 : vector<16x4x128xf32>
    %13 = vector.shape_cast %2 : vector<1x128xf32> to vector<1x1x128xf32>
    %14 = vector.broadcast %13 : vector<1x1x128xf32> to vector<16x4x128xf32>
    %15 = arith.addf %12, %14 : vector<16x4x128xf32>
    %16 = arith.negf %15 : vector<16x4x128xf32>
    %17 = math.exp %16 : vector<16x4x128xf32>
    %cst_11 = arith.constant 1.000000e+00 : f32
    %18 = vector.broadcast %cst_11 : f32 to vector<16x4x128xf32>
    %19 = arith.addf %18, %17 : vector<16x4x128xf32>
    %20 = arith.divf %18, %19 : vector<16x4x128xf32>
    %cst_12 = arith.constant 1.000000e+00 : f32
    %21 = vector.broadcast %cst_12 : f32 to vector<16x4x128xf32>
    %22 = arith.subf %21, %20 : vector<16x4x128xf32>
    %23 = arith.mulf %20, %22 : vector<16x4x128xf32>
    %24 = arith.mulf %23, %9 : vector<16x4x128xf32>
    %25 = vector.shape_cast %24 : vector<16x4x128xf32> to vector<64x128xf32>
    %cst_13 = arith.constant dense<0.000000e+00> : vector<64x128xf32>
    %26 = tpu.matmul %25, %4, %cst_13 {dimension_numbers = #tpu.dot_dimension_numbers<[1], [0], [0], [1], [0, 0, 1, 1], [], []>} : vector<64x128xf32>, vector<128x128xf32>, vector<64x128xf32> -> vector<64x128xf32>
    %27 = vector.shape_cast %26 : vector<64x128xf32> to vector<16x4x128xf32>
    %28 = arith.mulf %23, %27 : vector<16x4x128xf32>
    %cst_14 = arith.constant dense<0.000000e+00> : vector<16x128xf32>
    %29 = vector.multi_reduction <add>, %28, %cst_14 [1] : vector<16x4x128xf32> to vector<16x128xf32>
    %cst_15 = arith.constant dense<0.000000e+00> : vector<16x8xf32>
    %30 = tpu.matmul %29, %5, %cst_15 {dimension_numbers = #tpu.dot_dimension_numbers<[1], [0], [0], [1], [0, 0, 1, 1], [], []>} : vector<16x128xf32>, vector<128x8xf32>, vector<16x8xf32> -> vector<16x8xf32>
    %31 = tpu.transpose %30, [1, 0] : vector<16x8xf32> -> vector<8x16xf32>
    %c0_16 = arith.constant 0 : index
    %c0_17 = arith.constant 0 : index
    %32 = vector.load %arg7[%c0_16, %c0_17] : memref<8x16xf32, #tpu.memory_space<vmem>>, vector<8x16xf32>
    tpu.vector_store %arg7[%c0_16, %c0_17], %31 {strides = array<i32>} : memref<8x16xf32, #tpu.memory_space<vmem>>, vector<8x16xf32>,
    return
  }
  func.func @transform_0(%arg0: i32) -> (i32, i32) {
    %c0_i32 = arith.constant 0 : i32
    %c0_i32_0 = arith.constant 0 : i32
    return %arg0, %c0_i32 : i32, i32
  }
  func.func @transform_1(%arg0: i32) -> (i32, i32) {
    %c0_i32 = arith.constant 0 : i32
    %c0_i32_0 = arith.constant 0 : i32
    %c0_i32_1 = arith.constant 0 : i32
    return %c0_i32, %c0_i32_0 : i32, i32
  }
  func.func @transform_2(%arg0: i32) -> (i32, i32) {
    %c0_i32 = arith.constant 0 : i32
    %c0_i32_0 = arith.constant 0 : i32
    %c0_i32_1 = arith.constant 0 : i32
    return %c0_i32, %c0_i32_0 : i32, i32
  }
  func.func @transform_3(%arg0: i32) -> (i32, i32) {
    %c0_i32 = arith.constant 0 : i32
    %c0_i32_0 = arith.constant 0 : i32
    %c0_i32_1 = arith.constant 0 : i32
    return %c0_i32, %c0_i32_0 : i32, i32
  }
  func.func @transform_4(%arg0: i32) -> (i32, i32) {
    %c0_i32 = arith.constant 0 : i32
    %c0_i32_0 = arith.constant 0 : i32
    %c0_i32_1 = arith.constant 0 : i32
    return %c0_i32, %c0_i32_0 : i32, i32
  }
  func.func @transform_5(%arg0: i32) -> (i32, i32) {
    %c0_i32 = arith.constant 0 : i32
    %c0_i32_0 = arith.constant 0 : i32
    %c0_i32_1 = arith.constant 0 : i32
    return %c0_i32, %c0_i32_0 : i32, i32
  }
  func.func @transform_6(%arg0: i32) -> (i32, i32) {
    %c0_i32 = arith.constant 0 : i32
    %c0_i32_0 = arith.constant 0 : i32
    return %c0_i32, %arg0 : i32, i32
  }
}

</mosaic_0001>

<llo_original>
// kernel: tpu_custom_call.1
$region0: #{tpu_custom_call.1}
  #allocation0 [shape = 'u32[]', space=smem, size = 0x4, offset = 0x4, fixed_abs, tag = 'smem constant byte address 0x4 - core index']
  #allocation1 [shape = 'u32[72,128]{1,0:T(1,128)}', space=vmem, size = 0x9000, scoped, tag = 'internal scratch']
  %s0 = inlined_call_operand.vmem [shape: f32[16,8], index: 0, kind: input, shape index: {}]
  %s1 = inlined_call_operand.vmem [shape: f32[8,128], index: 1, kind: input, shape index: {}]
  %s2 = inlined_call_operand.vmem [shape: f32[1,128], index: 2, kind: input, shape index: {}]
  %s3 = inlined_call_operand.vmem [shape: f32[4,128], index: 3, kind: input, shape index: {}]
  %s4 = inlined_call_operand.vmem [shape: f32[128,128], index: 4, kind: input, shape index: {}]
  %s5 = inlined_call_operand.vmem [shape: f32[128,8], index: 5, kind: input, shape index: {}]
  %s6 = inlined_call_operand.hbm [shape: f32[8,16], index: 6, kind: output, shape index: {}]
  %s7 = sld [smem:[#allocation0]]
  $region34: #{tpu_custom_call.1} parent=0
    _
  %s9 = ssub.s32 1, %s7
  %s10 = scalar_select 0, %s9, %s7
  $region1: #{tpu_custom_call.1} parent=0
    #allocation2 [shape = 'u8[4096]{0}', space=vmem, size = 0x1000, scoped, tag = 'output window, operand 0, single buffered']
    #allocation3 [shape = 's32[1]{0}', space=sflag, size = 0x4, scoped, tag = 'scoped memory for tpu_custom_call.1']
    %11 = vsyncpa [#allocation3], 0
    // Predicated region
    $region2: #{tpu_custom_call.1} parent=1 // pred_check
      _
    $region3: #{tpu_custom_call.1} parent=1 // pred_check_branch
      %13 = sbr.rel (0) target = $region5
    $region4: #{tpu_custom_call.1} parent=1 // pred_region
      _
    $region5: #{tpu_custom_call.1} parent=1 // pred_fallthru
      _
    // Predicated region
    $region6: #{tpu_custom_call.1} parent=1 // pred_check
      _
    $region7: #{tpu_custom_call.1} parent=1 // pred_check_branch
      %15 = sbr.rel (0) target = $region9
    $region8: #{tpu_custom_call.1} parent=1 // pred_region
      _
    $region9: #{tpu_custom_call.1} parent=1 // pred_fallthru
      _
    // Predicated region
    $region10: #{tpu_custom_call.1} parent=1 // pred_check
      _
    $region11: #{tpu_custom_call.1} parent=1 // pred_check_branch
      %17 = sbr.rel (0) target = $region13
    $region12: #{tpu_custom_call.1} parent=1 // pred_region
      _
    $region13: #{tpu_custom_call.1} parent=1 // pred_fallthru
      _
    // Predicated region
    $region14: #{tpu_custom_call.1} parent=1 // pred_check
      _
    $region15: #{tpu_custom_call.1} parent=1 // pred_check_branch
      %19 = sbr.rel (0) target = $region17
    $region16: #{tpu_custom_call.1} parent=1 // pred_region
      _
    $region17: #{tpu_custom_call.1} parent=1 // pred_fallthru
      _
    // Predicated region
    $region18: #{tpu_custom_call.1} parent=1 // pred_check
      _
    $region19: #{tpu_custom_call.1} parent=1 // pred_check_branch
      %21 = sbr.rel (0) target = $region21
    $region20: #{tpu_custom_call.1} parent=1 // pred_region
      _
    $region21: #{tpu_custom_call.1} parent=1 // pred_fallthru
      _
    // Predicated region
    $region22: #{tpu_custom_call.1} parent=1 // pred_check
      _
    $region23: #{tpu_custom_call.1} parent=1 // pred_check_branch
      %23 = sbr.rel (0) target = $region25
    $region24: #{tpu_custom_call.1} parent=1 // pred_region
      _
    $region25: #{tpu_custom_call.1} parent=1 // pred_fallthru
      _
    %v24 = vld [vmem:[%s0] sm:$0xff]
    %v25 = vld [vmem:[%s0 + $0x8] sm:$0xff]
    %v26 = vld [vmem:[%s1] sm:$0xff]
    %v27 = vld [vmem:[%s2] sm:$0x1]
    %v28 = vld [vmem:[%s3] sm:$0xf]
    %v29 = vld [vmem:[%s4] sm:$0xff]
    %v30 = vld [vmem:[%s4 + $0x8] sm:$0xff]
    %v31 = vld [vmem:[%s4 + $0x10] sm:$0xff]
    %v32 = vld [vmem:[%s4 + $0x18] sm:$0xff]
    %v33 = vld [vmem:[%s4 + $0x20] sm:$0xff]
    %v34 = vld [vmem:[%s4 + $0x28] sm:$0xff]
    %v35 = vld [vmem:[%s4 + $0x30] sm:$0xff]
    %v36 = vld [vmem:[%s4 + $0x38] sm:$0xff]
    %v37 = vld [vmem:[%s4 + $0x40] sm:$0xff]
    %v38 = vld [vmem:[%s4 + $0x48] sm:$0xff]
    %v39 = vld [vmem:[%s4 + $0x50] sm:$0xff]
    %v40 = vld [vmem:[%s4 + $0x58] sm:$0xff]
    %v41 = vld [vmem:[%s4 + $0x60] sm:$0xff]
    %v42 = vld [vmem:[%s4 + $0x68] sm:$0xff]
    %v43 = vld [vmem:[%s4 + $0x70] sm:$0xff]
    %v44 = vld [vmem:[%s4 + $0x78] sm:$0xff]
    %v45 = vld [vmem:[%s5] sm:$0xff]
    %v46 = vld [vmem:[%s5 + $0x8] sm:$0xff]
    %v47 = vld [vmem:[%s5 + $0x10] sm:$0xff]
    %v48 = vld [vmem:[%s5 + $0x18] sm:$0xff]
    %v49 = vld [vmem:[%s5 + $0x20] sm:$0xff]
    %v50 = vld [vmem:[%s5 + $0x28] sm:$0xff]
    %v51 = vld [vmem:[%s5 + $0x30] sm:$0xff]
    %v52 = vld [vmem:[%s5 + $0x38] sm:$0xff]
    %v53 = vld [vmem:[%s5 + $0x40] sm:$0xff]
    %v54 = vld [vmem:[%s5 + $0x48] sm:$0xff]
    %v55 = vld [vmem:[%s5 + $0x50] sm:$0xff]
    %v56 = vld [vmem:[%s5 + $0x58] sm:$0xff]
    %v57 = vld [vmem:[%s5 + $0x60] sm:$0xff]
    %v58 = vld [vmem:[%s5 + $0x68] sm:$0xff]
    %v59 = vld [vmem:[%s5 + $0x70] sm:$0xff]
    %v60 = vld [vmem:[%s5 + $0x78] sm:$0xff]
    %vm61 = vcmask 64512
    %v63 = vsel %vm61, %v24, 0
    %v66 = vsel %vm61, %v25, 0
    %68 = vmatpush.msra.mxu0 0.0
    %69 = vmatpush.msra.mxu0 0.0
    %70 = vmatpush.msra.mxu0 0.0
    %71 = vmatpush.msra.mxu0 0.0
    %72 = vmatpush.msra.mxu0 0.0
    %73 = vmatpush.msra.mxu0 0.0
    %74 = vmatpush.msra.mxu0 0.0
    %75 = vmatpush.msra.mxu0 0.0
    %76 = vmatpush.msra.mxu0 0.0
    %77 = vmatpush.msra.mxu0 0.0
    %78 = vmatpush.msra.mxu0 0.0
    %79 = vmatpush.msra.mxu0 0.0
    %80 = vmatpush.msra.mxu0 0.0
    %81 = vmatpush.msra.mxu0 0.0
    %82 = vmatpush.msra.mxu0 0.0
    %83 = vmatpush.msra.mxu0 %v26
    %84 = vmatmul.f32.gmra.mxu0 %v63
    %v85 = vpop.f32.mrf.mxu0
    %v86 = vadd.f32 0.0, %v85
    %87 = vmatmul.f32.gmra.mxu0 %v66
    %v88 = vpop.f32.mrf.mxu0
    %v89 = vadd.f32 0.0, %v88
    %90 = vdwg.mxu0
    %v93 = vrot.slane %v86, 1
    %v94 = vrot.slane %v86, 2
    %v95 = vrot.slane %v86, 3
    %v96 = vrot.slane %v86, 4
    %v97 = vrot.slane %v86, 5
    %v98 = vrot.slane %v86, 6
    %v99 = vrot.slane %v86, 7
    %v100 = vrot.slane %v89, 1
    %v101 = vrot.slane %v89, 2
    %v102 = vrot.slane %v89, 3
    %v103 = vrot.slane %v89, 4
    %v104 = vrot.slane %v89, 5
    %v105 = vrot.slane %v89, 6
    %v106 = vrot.slane %v89, 7
    %v107 = vperm.slane %v86, 0
    %v108 = vperm.slane %v93, 0
    %v109 = vperm.slane %v94, 0
    %v110 = vperm.slane %v95, 0
    %v111 = vperm.slane %v96, 0
    %v112 = vperm.slane %v97, 0
    %v113 = vperm.slane %v98, 0
    %v114 = vperm.slane %v99, 0
    %v115 = vperm.slane %v89, 0
    %v116 = vperm.slane %v100, 0
    %v117 = vperm.slane %v101, 0
    %v118 = vperm.slane %v102, 0
    %v119 = vperm.slane %v103, 0
    %v120 = vperm.slane %v104, 0
    %v121 = vperm.slane %v105, 0
    %v122 = vperm.slane %v106, 0
    %v139 = vmul.f32 %v107, %v28
    %v140 = vmul.f32 %v108, %v28
    %v141 = vmul.f32 %v109, %v28
    %v142 = vmul.f32 %v110, %v28
    %v143 = vmul.f32 %v111, %v28
    %v144 = vmul.f32 %v112, %v28
    %v145 = vmul.f32 %v113, %v28
    %v146 = vmul.f32 %v114, %v28
    %v147 = vmul.f32 %v115, %v28
    %v148 = vmul.f32 %v116, %v28
    %v149 = vmul.f32 %v117, %v28
    %v150 = vmul.f32 %v118, %v28
    %v151 = vmul.f32 %v119, %v28
    %v152 = vmul.f32 %v120, %v28
    %v153 = vmul.f32 %v121, %v28
    %v154 = vmul.f32 %v122, %v28
    %v156 = vperm.slane %v27, 0
    %v158 = vadd.f32 %v139, %v156
    %v159 = vadd.f32 %v140, %v156
    %v160 = vadd.f32 %v141, %v156
    %v161 = vadd.f32 %v142, %v156
    %v162 = vadd.f32 %v143, %v156
    %v163 = vadd.f32 %v144, %v156
    %v164 = vadd.f32 %v145, %v156
    %v165 = vadd.f32 %v146, %v156
    %v166 = vadd.f32 %v147, %v156
    %v167 = vadd.f32 %v148, %v156
    %v168 = vadd.f32 %v149, %v156
    %v169 = vadd.f32 %v150, %v156
    %v170 = vadd.f32 %v151, %v156
    %v171 = vadd.f32 %v152, %v156
    %v172 = vadd.f32 %v153, %v156
    %v173 = vadd.f32 %v154, %v156
    %v174 = vxor.u32 %v158, 2147483648
    %v175 = vxor.u32 %v159, 2147483648
    %v176 = vxor.u32 %v160, 2147483648
    %v177 = vxor.u32 %v161, 2147483648
    %v178 = vxor.u32 %v162, 2147483648
    %v179 = vxor.u32 %v163, 2147483648
    %v180 = vxor.u32 %v164, 2147483648
    %v181 = vxor.u32 %v165, 2147483648
    %v182 = vxor.u32 %v166, 2147483648
    %v183 = vxor.u32 %v167, 2147483648
    %v184 = vxor.u32 %v168, 2147483648
    %v185 = vxor.u32 %v169, 2147483648
    %v186 = vxor.u32 %v170, 2147483648
    %v187 = vxor.u32 %v171, 2147483648
    %v188 = vxor.u32 %v172, 2147483648
    %v189 = vxor.u32 %v173, 2147483648
    %v190 = vmul.f32 %v174, 1.442695
    %v191 = vpow.pop %v190
    %v192 = vmul.f32 %v175, 1.442695
    %v193 = vpow.pop %v192
    %v194 = vmul.f32 %v176, 1.442695
    %v195 = vpow.pop %v194
    %v196 = vmul.f32 %v177, 1.442695
    %v197 = vpow.pop %v196
    %v198 = vmul.f32 %v178, 1.442695
    %v199 = vpow.pop %v198
    %v200 = vmul.f32 %v179, 1.442695
    %v201 = vpow.pop %v200
    %v202 = vmul.f32 %v180, 1.442695
    %v203 = vpow.pop %v202
    %v204 = vmul.f32 %v181, 1.442695
    %v205 = vpow.pop %v204
    %v206 = vmul.f32 %v182, 1.442695
    %v207 = vpow.pop %v206
    %v208 = vmul.f32 %v183, 1.442695
    %v209 = vpow.pop %v208
    %v210 = vmul.f32 %v184, 1.442695
    %v211 = vpow.pop %v210
    %v212 = vmul.f32 %v185, 1.442695
    %v213 = vpow.pop %v212
    %v214 = vmul.f32 %v186, 1.442695
    %v215 = vpow.pop %v214
    %v216 = vmul.f32 %v187, 1.442695
    %v217 = vpow.pop %v216
    %v218 = vmul.f32 %v188, 1.442695
    %v219 = vpow.pop %v218
    %v220 = vmul.f32 %v189, 1.442695
    %v221 = vpow.pop %v220
    %v222 = vadd.f32 %v191, 1.0
    %v223 = vadd.f32 %v193, 1.0
    %v224 = vadd.f32 %v195, 1.0
    %v225 = vadd.f32 %v197, 1.0
    %v226 = vadd.f32 %v199, 1.0
    %v227 = vadd.f32 %v201, 1.0
    %v228 = vadd.f32 %v203, 1.0
    %v229 = vadd.f32 %v205, 1.0
    %v230 = vadd.f32 %v207, 1.0
    %v231 = vadd.f32 %v209, 1.0
    %v232 = vadd.f32 %v211, 1.0
    %v233 = vadd.f32 %v213, 1.0
    %v234 = vadd.f32 %v215, 1.0
    %v235 = vadd.f32 %v217, 1.0
    %v236 = vadd.f32 %v219, 1.0
    %v237 = vadd.f32 %v221, 1.0
    %v238 = vrcp.pop %v222
    %v239 = vmul.f32 %v222, %v238
    %v240 = vsub.f32 1.0, %v239
    %v241 = vmul.f32 %v238, %v240
    %v242 = vadd.f32 %v238, %v241
    %vm243 = vweird.f32 %v222
    %vm244 = vweird.f32 %v238
    %vm245 = vmor %vm243, %vm244
    %v246 = vsel %vm245, %v238, %v242
    %v247 = vand.u32 2147483647, %v222
    %vm248 = vcmp.eq.f32.partialorder %v247, 8.507059e+37
    %v249 = vand.u32 %v222, 2147483648
    %v250 = vor.u32 1.1754944e-38, %v249
    %v251 = vsel %vm248, %v250, %v246
    %v252 = vmul.f32 1.0, %v251
    %v253 = vrcp.pop %v223
    %v254 = vmul.f32 %v223, %v253
    %v255 = vsub.f32 1.0, %v254
    %v256 = vmul.f32 %v253, %v255
    %v257 = vadd.f32 %v253, %v256
    %vm258 = vweird.f32 %v223
    %vm259 = vweird.f32 %v253
    %vm260 = vmor %vm258, %vm259
    %v261 = vsel %vm260, %v253, %v257
    %v262 = vand.u32 2147483647, %v223
    %vm263 = vcmp.eq.f32.partialorder %v262, 8.507059e+37
    %v264 = vand.u32 %v223, 2147483648
    %v265 = vor.u32 1.1754944e-38, %v264
    %v266 = vsel %vm263, %v265, %v261
    %v267 = vmul.f32 1.0, %v266
    %v268 = vrcp.pop %v224
    %v269 = vmul.f32 %v224, %v268
    %v270 = vsub.f32 1.0, %v269
    %v271 = vmul.f32 %v268, %v270
    %v272 = vadd.f32 %v268, %v271
    %vm273 = vweird.f32 %v224
    %vm274 = vweird.f32 %v268
    %vm275 = vmor %vm273, %vm274
    %v276 = vsel %vm275, %v268, %v272
    %v277 = vand.u32 2147483647, %v224
    %vm278 = vcmp.eq.f32.partialorder %v277, 8.507059e+37
    %v279 = vand.u32 %v224, 2147483648
    %v280 = vor.u32 1.1754944e-38, %v279
    %v281 = vsel %vm278, %v280, %v276
    %v282 = vmul.f32 1.0, %v281
    %v283 = vrcp.pop %v225
    %v284 = vmul.f32 %v225, %v283
    %v285 = vsub.f32 1.0, %v284
    %v286 = vmul.f32 %v283, %v285
    %v287 = vadd.f32 %v283, %v286
    %vm288 = vweird.f32 %v225
    %vm289 = vweird.f32 %v283
    %vm290 = vmor %vm288, %vm289
    %v291 = vsel %vm290, %v283, %v287
    %v292 = vand.u32 2147483647, %v225
    %vm293 = vcmp.eq.f32.partialorder %v292, 8.507059e+37
    %v294 = vand.u32 %v225, 2147483648
    %v295 = vor.u32 1.1754944e-38, %v294
    %v296 = vsel %vm293, %v295, %v291
    %v297 = vmul.f32 1.0, %v296
    %v298 = vrcp.pop %v226
    %v299 = vmul.f32 %v226, %v298
    %v300 = vsub.f32 1.0, %v299
    %v301 = vmul.f32 %v298, %v300
    %v302 = vadd.f32 %v298, %v301
    %vm303 = vweird.f32 %v226
    %vm304 = vweird.f32 %v298
    %vm305 = vmor %vm303, %vm304
    %v306 = vsel %vm305, %v298, %v302
    %v307 = vand.u32 2147483647, %v226
    %vm308 = vcmp.eq.f32.partialorder %v307, 8.507059e+37
    %v309 = vand.u32 %v226, 2147483648
    %v310 = vor.u32 1.1754944e-38, %v309
    %v311 = vsel %vm308, %v310, %v306
    %v312 = vmul.f32 1.0, %v311
    %v313 = vrcp.pop %v227
    %v314 = vmul.f32 %v227, %v313
    %v315 = vsub.f32 1.0, %v314
    %v316 = vmul.f32 %v313, %v315
    %v317 = vadd.f32 %v313, %v316
    %vm318 = vweird.f32 %v227
    %vm319 = vweird.f32 %v313
    %vm320 = vmor %vm318, %vm319
    %v321 = vsel %vm320, %v313, %v317
    %v322 = vand.u32 2147483647, %v227
    %vm323 = vcmp.eq.f32.partialorder %v322, 8.507059e+37
    %v324 = vand.u32 %v227, 2147483648
    %v325 = vor.u32 1.1754944e-38, %v324
    %v326 = vsel %vm323, %v325, %v321
    %v327 = vmul.f32 1.0, %v326
    %v328 = vrcp.pop %v228
    %v329 = vmul.f32 %v228, %v328
    %v330 = vsub.f32 1.0, %v329
    %v331 = vmul.f32 %v328, %v330
    %v332 = vadd.f32 %v328, %v331
    %vm333 = vweird.f32 %v228
    %vm334 = vweird.f32 %v328
    %vm335 = vmor %vm333, %vm334
    %v336 = vsel %vm335, %v328, %v332
    %v337 = vand.u32 2147483647, %v228
    %vm338 = vcmp.eq.f32.partialorder %v337, 8.507059e+37
    %v339 = vand.u32 %v228, 2147483648
    %v340 = vor.u32 1.1754944e-38, %v339
    %v341 = vsel %vm338, %v340, %v336
    %v342 = vmul.f32 1.0, %v341
    %v343 = vrcp.pop %v229
    %v344 = vmul.f32 %v229, %v343
    %v345 = vsub.f32 1.0, %v344
    %v346 = vmul.f32 %v343, %v345
    %v347 = vadd.f32 %v343, %v346
    %vm348 = vweird.f32 %v229
    %vm349 = vweird.f32 %v343
    %vm350 = vmor %vm348, %vm349
    %v351 = vsel %vm350, %v343, %v347
    %v352 = vand.u32 2147483647, %v229
    %vm353 = vcmp.eq.f32.partialorder %v352, 8.507059e+37
    %v354 = vand.u32 %v229, 2147483648
    %v355 = vor.u32 1.1754944e-38, %v354
    %v356 = vsel %vm353, %v355, %v351
    %v357 = vmul.f32 1.0, %v356
    %v358 = vrcp.pop %v230
    %v359 = vmul.f32 %v230, %v358
    %v360 = vsub.f32 1.0, %v359
    %v361 = vmul.f32 %v358, %v360
    %v362 = vadd.f32 %v358, %v361
    %vm363 = vweird.f32 %v230
    %vm364 = vweird.f32 %v358
    %vm365 = vmor %vm363, %vm364
    %v366 = vsel %vm365, %v358, %v362
    %v367 = vand.u32 2147483647, %v230
    %vm368 = vcmp.eq.f32.partialorder %v367, 8.507059e+37
    %v369 = vand.u32 %v230, 2147483648
    %v370 = vor.u32 1.1754944e-38, %v369
    %v371 = vsel %vm368, %v370, %v366
    %v372 = vmul.f32 1.0, %v371
    %v373 = vrcp.pop %v231
    %v374 = vmul.f32 %v231, %v373
    %v375 = vsub.f32 1.0, %v374
    %v376 = vmul.f32 %v373, %v375
    %v377 = vadd.f32 %v373, %v376
    %vm378 = vweird.f32 %v231
    %vm379 = vweird.f32 %v373
    %vm380 = vmor %vm378, %vm379
    %v381 = vsel %vm380, %v373, %v377
    %v382 = vand.u32 2147483647, %v231
    %vm383 = vcmp.eq.f32.partialorder %v382, 8.507059e+37
    %v384 = vand.u32 %v231, 2147483648
    %v385 = vor.u32 1.1754944e-38, %v384
    %v386 = vsel %vm383, %v385, %v381
    %v387 = vmul.f32 1.0, %v386
    %v388 = vrcp.pop %v232
    %v389 = vmul.f32 %v232, %v388
    %v390 = vsub.f32 1.0, %v389
    %v391 = vmul.f32 %v388, %v390
    %v392 = vadd.f32 %v388, %v391
    %vm393 = vweird.f32 %v232
    %vm394 = vweird.f32 %v388
    %vm395 = vmor %vm393, %vm394
    %v396 = vsel %vm395, %v388, %v392
    %v397 = vand.u32 2147483647, %v232
    %vm398 = vcmp.eq.f32.partialorder %v397, 8.507059e+37
    %v399 = vand.u32 %v232, 2147483648
    %v400 = vor.u32 1.1754944e-38, %v399
    %v401 = vsel %vm398, %v400, %v396
    %v402 = vmul.f32 1.0, %v401
    %v403 = vrcp.pop %v233
    %v404 = vmul.f32 %v233, %v403
    %v405 = vsub.f32 1.0, %v404
    %v406 = vmul.f32 %v403, %v405
    %v407 = vadd.f32 %v403, %v406
    %vm408 = vweird.f32 %v233
    %vm409 = vweird.f32 %v403
    %vm410 = vmor %vm408, %vm409
    %v411 = vsel %vm410, %v403, %v407
    %v412 = vand.u32 2147483647, %v233
    %vm413 = vcmp.eq.f32.partialorder %v412, 8.507059e+37
    %v414 = vand.u32 %v233, 2147483648
    %v415 = vor.u32 1.1754944e-38, %v414
    %v416 = vsel %vm413, %v415, %v411
    %v417 = vmul.f32 1.0, %v416
    %v418 = vrcp.pop %v234
    %v419 = vmul.f32 %v234, %v418
    %v420 = vsub.f32 1.0, %v419
    %v421 = vmul.f32 %v418, %v420
    %v422 = vadd.f32 %v418, %v421
    %vm423 = vweird.f32 %v234
    %vm424 = vweird.f32 %v418
    %vm425 = vmor %vm423, %vm424
    %v426 = vsel %vm425, %v418, %v422
    %v427 = vand.u32 2147483647, %v234
    %vm428 = vcmp.eq.f32.partialorder %v427, 8.507059e+37
    %v429 = vand.u32 %v234, 2147483648
    %v430 = vor.u32 1.1754944e-38, %v429
    %v431 = vsel %vm428, %v430, %v426
    %v432 = vmul.f32 1.0, %v431
    %v433 = vrcp.pop %v235
    %v434 = vmul.f32 %v235, %v433
    %v435 = vsub.f32 1.0, %v434
    %v436 = vmul.f32 %v433, %v435
    %v437 = vadd.f32 %v433, %v436
    %vm438 = vweird.f32 %v235
    %vm439 = vweird.f32 %v433
    %vm440 = vmor %vm438, %vm439
    %v441 = vsel %vm440, %v433, %v437
    %v442 = vand.u32 2147483647, %v235
    %vm443 = vcmp.eq.f32.partialorder %v442, 8.507059e+37
    %v444 = vand.u32 %v235, 2147483648
    %v445 = vor.u32 1.1754944e-38, %v444
    %v446 = vsel %vm443, %v445, %v441
    %v447 = vmul.f32 1.0, %v446
    %v448 = vrcp.pop %v236
    %v449 = vmul.f32 %v236, %v448
    %v450 = vsub.f32 1.0, %v449
    %v451 = vmul.f32 %v448, %v450
    %v452 = vadd.f32 %v448, %v451
    %vm453 = vweird.f32 %v236
    %vm454 = vweird.f32 %v448
    %vm455 = vmor %vm453, %vm454
    %v456 = vsel %vm455, %v448, %v452
    %v457 = vand.u32 2147483647, %v236
    %vm458 = vcmp.eq.f32.partialorder %v457, 8.507059e+37
    %v459 = vand.u32 %v236, 2147483648
    %v460 = vor.u32 1.1754944e-38, %v459
    %v461 = vsel %vm458, %v460, %v456
    %v462 = vmul.f32 1.0, %v461
    %v463 = vrcp.pop %v237
    %v464 = vmul.f32 %v237, %v463
    %v465 = vsub.f32 1.0, %v464
    %v466 = vmul.f32 %v463, %v465
    %v467 = vadd.f32 %v463, %v466
    %vm468 = vweird.f32 %v237
    %vm469 = vweird.f32 %v463
    %vm470 = vmor %vm468, %vm469
    %v471 = vsel %vm470, %v463, %v467
    %v472 = vand.u32 2147483647, %v237
    %vm473 = vcmp.eq.f32.partialorder %v472, 8.507059e+37
    %v474 = vand.u32 %v237, 2147483648
    %v475 = vor.u32 1.1754944e-38, %v474
    %v476 = vsel %vm473, %v475, %v471
    %v477 = vmul.f32 1.0, %v476
    %v478 = vsub.f32 1.0, %v252
    %v479 = vsub.f32 1.0, %v267
    %v480 = vsub.f32 1.0, %v282
    %v481 = vsub.f32 1.0, %v297
    %v482 = vsub.f32 1.0, %v312
    %v483 = vsub.f32 1.0, %v327
    %v484 = vsub.f32 1.0, %v342
    %v485 = vsub.f32 1.0, %v357
    %v486 = vsub.f32 1.0, %v372
    %v487 = vsub.f32 1.0, %v387
    %v488 = vsub.f32 1.0, %v402
    %v489 = vsub.f32 1.0, %v417
    %v490 = vsub.f32 1.0, %v432
    %v491 = vsub.f32 1.0, %v447
    %v492 = vsub.f32 1.0, %v462
    %v493 = vsub.f32 1.0, %v477
    %v494 = vmul.f32 %v252, %v478
    %v495 = vmul.f32 %v267, %v479
    %v496 = vmul.f32 %v282, %v480
    %v497 = vmul.f32 %v297, %v481
    %v498 = vmul.f32 %v312, %v482
    %v499 = vmul.f32 %v327, %v483
    %v500 = vmul.f32 %v342, %v484
    %v501 = vmul.f32 %v357, %v485
    %v502 = vmul.f32 %v372, %v486
    %v503 = vmul.f32 %v387, %v487
    %v504 = vmul.f32 %v402, %v488
    %v505 = vmul.f32 %v417, %v489
    %v506 = vmul.f32 %v432, %v490
    %v507 = vmul.f32 %v447, %v491
    %v508 = vmul.f32 %v462, %v492
    %v509 = vmul.f32 %v477, %v493
    %v510 = vmul.f32 %v494, %v107
    %v511 = vmul.f32 %v495, %v108
    %v512 = vmul.f32 %v496, %v109
    %v513 = vmul.f32 %v497, %v110
    %v514 = vmul.f32 %v498, %v111
    %v515 = vmul.f32 %v499, %v112
    %v516 = vmul.f32 %v500, %v113
    %v517 = vmul.f32 %v501, %v114
    %v518 = vmul.f32 %v502, %v115
    %v519 = vmul.f32 %v503, %v116
    %v520 = vmul.f32 %v504, %v117
    %v521 = vmul.f32 %v505, %v118
    %v522 = vmul.f32 %v506, %v119
    %v523 = vmul.f32 %v507, %v120
    %v524 = vmul.f32 %v508, %v121
    %v525 = vmul.f32 %v509, %v122
    %542 = vst [vmem:[#allocation1] ss:$2 sm:$0xff] %v510
    %s543 = scalar_lea.vmem [#allocation1], 1
    %544 = vst [vmem:[%s543] ss:$2 sm:$0xff] %v511
    %s545 = scalar_lea.vmem [#allocation1], 16
    %546 = vst [vmem:[%s545] ss:$2 sm:$0xff] %v512
    %s547 = scalar_lea.vmem [#allocation1], 17
    %548 = vst [vmem:[%s547] ss:$2 sm:$0xff] %v513
    %s549 = scalar_lea.vmem [#allocation1], 32
    %550 = vst [vmem:[%s549] ss:$2 sm:$0xff] %v514
    %s551 = scalar_lea.vmem [#allocation1], 33
    %552 = vst [vmem:[%s551] ss:$2 sm:$0xff] %v515
    %s553 = scalar_lea.vmem [#allocation1], 48
    %554 = vst [vmem:[%s553] ss:$2 sm:$0xff] %v516
    %s555 = scalar_lea.vmem [#allocation1], 49
    %556 = vst [vmem:[%s555] ss:$2 sm:$0xff] %v517
    %v557 = vld.sshfl [vmem:[#allocation1] sm:$0xff pattern:$0x75316420]
    %v558 = vld.sshfl [vmem:[#allocation1 + $0x10] sm:$0xff pattern:$0x75316420]
    %v559 = vld.sshfl [vmem:[#allocation1 + $0x20] sm:$0xff pattern:$0x75316420]
    %v560 = vld.sshfl [vmem:[#allocation1 + $0x30] sm:$0xff pattern:$0x75316420]
    %561 = vst [vmem:[#allocation1] ss:$2 sm:$0xff] %v518
    %562 = vst [vmem:[%s543] ss:$2 sm:$0xff] %v519
    %563 = vst [vmem:[%s545] ss:$2 sm:$0xff] %v520
    %564 = vst [vmem:[%s547] ss:$2 sm:$0xff] %v521
    %565 = vst [vmem:[%s549] ss:$2 sm:$0xff] %v522
    %566 = vst [vmem:[%s551] ss:$2 sm:$0xff] %v523
    %567 = vst [vmem:[%s553] ss:$2 sm:$0xff] %v524
    %568 = vst [vmem:[%s555] ss:$2 sm:$0xff] %v525
    %v569 = vld.sshfl [vmem:[#allocation1] sm:$0xff pattern:$0x75316420]
    %v570 = vld.sshfl [vmem:[#allocation1 + $0x10] sm:$0xff pattern:$0x75316420]
    %v571 = vld.sshfl [vmem:[#allocation1 + $0x20] sm:$0xff pattern:$0x75316420]
    %v572 = vld.sshfl [vmem:[#allocation1 + $0x30] sm:$0xff pattern:$0x75316420]
    %581 = vmatpush.msra.mxu0 %v44
    %582 = vmatpush.msra.mxu0 %v43
    %583 = vmatpush.msra.mxu0 %v42
    %584 = vmatpush.msra.mxu0 %v41
    %585 = vmatpush.msra.mxu0 %v40
    %586 = vmatpush.msra.mxu0 %v39
    %587 = vmatpush.msra.mxu0 %v38
    %588 = vmatpush.msra.mxu0 %v37
    %589 = vmatpush.msra.mxu0 %v36
    %590 = vmatpush.msra.mxu0 %v35
    %591 = vmatpush.msra.mxu0 %v34
    %592 = vmatpush.msra.mxu0 %v33
    %593 = vmatpush.msra.mxu0 %v32
    %594 = vmatpush.msra.mxu0 %v31
    %595 = vmatpush.msra.mxu0 %v30
    %596 = vmatpush.msra.mxu0 %v29
    %597 = vmatmul.f32.gmra.mxu0 %v557
    %v598 = vpop.f32.mrf.mxu0
    %v599 = vadd.f32 0.0, %v598
    %600 = vmatmul.f32.gmra.mxu0 %v558
    %v601 = vpop.f32.mrf.mxu0
    %v602 = vadd.f32 0.0, %v601
    %603 = vmatmul.f32.gmra.mxu0 %v559
    %v604 = vpop.f32.mrf.mxu0
    %v605 = vadd.f32 0.0, %v604
    %606 = vmatmul.f32.gmra.mxu0 %v560
    %v607 = vpop.f32.mrf.mxu0
    %v608 = vadd.f32 0.0, %v607
    %609 = vmatmul.f32.gmra.mxu0 %v569
    %v610 = vpop.f32.mrf.mxu0
    %v611 = vadd.f32 0.0, %v610
    %612 = vmatmul.f32.gmra.mxu0 %v570
    %v613 = vpop.f32.mrf.mxu0
    %v614 = vadd.f32 0.0, %v613
    %615 = vmatmul.f32.gmra.mxu0 %v571
    %v616 = vpop.f32.mrf.mxu0
    %v617 = vadd.f32 0.0, %v616
    %618 = vmatmul.f32.gmra.mxu0 %v572
    %v619 = vpop.f32.mrf.mxu0
    %v620 = vadd.f32 0.0, %v619
    %621 = vdwg.mxu0
    %v630 = vrot.slane %v599, 4
    %v631 = vrot.slane %v602, 4
    %v632 = vrot.slane %v605, 4
    %v633 = vrot.slane %v608, 4
    %v634 = vrot.slane %v611, 4
    %v635 = vrot.slane %v614, 4
    %v636 = vrot.slane %v617, 4
    %v637 = vrot.slane %v620, 4
    %v646 = vmul.f32 %v494, %v599
    %v647 = vmul.f32 %v495, %v630
    %v648 = vmul.f32 %v496, %v602
    %v649 = vmul.f32 %v497, %v631
    %v650 = vmul.f32 %v498, %v605
    %v651 = vmul.f32 %v499, %v632
    %v652 = vmul.f32 %v500, %v608
    %v653 = vmul.f32 %v501, %v633
    %v654 = vmul.f32 %v502, %v611
    %v655 = vmul.f32 %v503, %v634
    %v656 = vmul.f32 %v504, %v614
    %v657 = vmul.f32 %v505, %v635
    %v658 = vmul.f32 %v506, %v617
    %v659 = vmul.f32 %v507, %v636
    %v660 = vmul.f32 %v508, %v620
    %v661 = vmul.f32 %v509, %v637
    %vm662 = vcmask 1043456
    %v663 = vsel %vm662, %v646, 0.0
    %v664 = vrot.slane %v663, 4
    %v665 = vadd.f32 %v663, %v664
    %v666 = vrot.slane %v665, 2
    %v667 = vadd.f32 %v665, %v666
    %v668 = vrot.slane %v667, 1
    %v669 = vadd.f32 %v667, %v668
    %v670 = vsel %vm662, %v647, 0.0
    %v671 = vrot.slane %v670, 4
    %v672 = vadd.f32 %v670, %v671
    %v673 = vrot.slane %v672, 2
    %v674 = vadd.f32 %v672, %v673
    %v675 = vrot.slane %v674, 1
    %v676 = vadd.f32 %v674, %v675
    %v677 = vsel %vm662, %v648, 0.0
    %v678 = vrot.slane %v677, 4
    %v679 = vadd.f32 %v677, %v678
    %v680 = vrot.slane %v679, 2
    %v681 = vadd.f32 %v679, %v680
    %v682 = vrot.slane %v681, 1
    %v683 = vadd.f32 %v681, %v682
    %v684 = vsel %vm662, %v649, 0.0
    %v685 = vrot.slane %v684, 4
    %v686 = vadd.f32 %v684, %v685
    %v687 = vrot.slane %v686, 2
    %v688 = vadd.f32 %v686, %v687
    %v689 = vrot.slane %v688, 1
    %v690 = vadd.f32 %v688, %v689
    %v691 = vsel %vm662, %v650, 0.0
    %v692 = vrot.slane %v691, 4
    %v693 = vadd.f32 %v691, %v692
    %v694 = vrot.slane %v693, 2
    %v695 = vadd.f32 %v693, %v694
    %v696 = vrot.slane %v695, 1
    %v697 = vadd.f32 %v695, %v696
    %v698 = vsel %vm662, %v651, 0.0
    %v699 = vrot.slane %v698, 4
    %v700 = vadd.f32 %v698, %v699
    %v701 = vrot.slane %v700, 2
    %v702 = vadd.f32 %v700, %v701
    %v703 = vrot.slane %v702, 1
    %v704 = vadd.f32 %v702, %v703
    %v705 = vsel %vm662, %v652, 0.0
    %v706 = vrot.slane %v705, 4
    %v707 = vadd.f32 %v705, %v706
    %v708 = vrot.slane %v707, 2
    %v709 = vadd.f32 %v707, %v708
    %v710 = vrot.slane %v709, 1
    %v711 = vadd.f32 %v709, %v710
    %v712 = vsel %vm662, %v653, 0.0
    %v713 = vrot.slane %v712, 4
    %v714 = vadd.f32 %v712, %v713
    %v715 = vrot.slane %v714, 2
    %v716 = vadd.f32 %v714, %v715
    %v717 = vrot.slane %v716, 1
    %v718 = vadd.f32 %v716, %v717
    %v719 = vsel %vm662, %v654, 0.0
    %v720 = vrot.slane %v719, 4
    %v721 = vadd.f32 %v719, %v720
    %v722 = vrot.slane %v721, 2
    %v723 = vadd.f32 %v721, %v722
    %v724 = vrot.slane %v723, 1
    %v725 = vadd.f32 %v723, %v724
    %v726 = vsel %vm662, %v655, 0.0
    %v727 = vrot.slane %v726, 4
    %v728 = vadd.f32 %v726, %v727
    %v729 = vrot.slane %v728, 2
    %v730 = vadd.f32 %v728, %v729
    %v731 = vrot.slane %v730, 1
    %v732 = vadd.f32 %v730, %v731
    %v733 = vsel %vm662, %v656, 0.0
    %v734 = vrot.slane %v733, 4
    %v735 = vadd.f32 %v733, %v734
    %v736 = vrot.slane %v735, 2
    %v737 = vadd.f32 %v735, %v736
    %v738 = vrot.slane %v737, 1
    %v739 = vadd.f32 %v737, %v738
    %v740 = vsel %vm662, %v657, 0.0
    %v741 = vrot.slane %v740, 4
    %v742 = vadd.f32 %v740, %v741
    %v743 = vrot.slane %v742, 2
    %v744 = vadd.f32 %v742, %v743
    %v745 = vrot.slane %v744, 1
    %v746 = vadd.f32 %v744, %v745
    %v747 = vsel %vm662, %v658, 0.0
    %v748 = vrot.slane %v747, 4
    %v749 = vadd.f32 %v747, %v748
    %v750 = vrot.slane %v749, 2
    %v751 = vadd.f32 %v749, %v750
    %v752 = vrot.slane %v751, 1
    %v753 = vadd.f32 %v751, %v752
    %v754 = vsel %vm662, %v659, 0.0
    %v755 = vrot.slane %v754, 4
    %v756 = vadd.f32 %v754, %v755
    %v757 = vrot.slane %v756, 2
    %v758 = vadd.f32 %v756, %v757
    %v759 = vrot.slane %v758, 1
    %v760 = vadd.f32 %v758, %v759
    %v761 = vsel %vm662, %v660, 0.0
    %v762 = vrot.slane %v761, 4
    %v763 = vadd.f32 %v761, %v762
    %v764 = vrot.slane %v763, 2
    %v765 = vadd.f32 %v763, %v764
    %v766 = vrot.slane %v765, 1
    %v767 = vadd.f32 %v765, %v766
    %v768 = vsel %vm662, %v661, 0.0
    %v769 = vrot.slane %v768, 4
    %v770 = vadd.f32 %v768, %v769
    %v771 = vrot.slane %v770, 2
    %v772 = vadd.f32 %v770, %v771
    %v773 = vrot.slane %v772, 1
    %v774 = vadd.f32 %v772, %v773
    %vm791 = vcmask 1041409
    %v792 = vsel %vm791, %v676, %v669
    %vm793 = vcmask 1042434
    %v794 = vsel %vm793, %v683, %v792
    %vm795 = vcmask 1043459
    %v796 = vsel %vm795, %v690, %v794
    %vm797 = vcmask 1044484
    %v798 = vsel %vm797, %v697, %v796
    %vm799 = vcmask 1045509
    %v800 = vsel %vm799, %v704, %v798
    %vm801 = vcmask 1046534
    %v802 = vsel %vm801, %v711, %v800
    %vm803 = vcmask 1047559
    %v804 = vsel %vm803, %v718, %v802
    %v805 = vsel %vm791, %v732, %v725
    %v806 = vsel %vm793, %v739, %v805
    %v807 = vsel %vm795, %v746, %v806
    %v808 = vsel %vm797, %v753, %v807
    %v809 = vsel %vm799, %v760, %v808
    %v810 = vsel %vm801, %v767, %v809
    %v811 = vsel %vm803, %v774, %v810
    %814 = vmatpush.msra.mxu0 %v60
    %815 = vmatpush.msra.mxu0 %v59
    %816 = vmatpush.msra.mxu0 %v58
    %817 = vmatpush.msra.mxu0 %v57
    %818 = vmatpush.msra.mxu0 %v56
    %819 = vmatpush.msra.mxu0 %v55
    %820 = vmatpush.msra.mxu0 %v54
    %821 = vmatpush.msra.mxu0 %v53
    %822 = vmatpush.msra.mxu0 %v52
    %823 = vmatpush.msra.mxu0 %v51
    %824 = vmatpush.msra.mxu0 %v50
    %825 = vmatpush.msra.mxu0 %v49
    %826 = vmatpush.msra.mxu0 %v48
    %827 = vmatpush.msra.mxu0 %v47
    %828 = vmatpush.msra.mxu0 %v46
    %829 = vmatpush.msra.mxu0 %v45
    %830 = vmatmul.f32.gmra.mxu0 %v804
    %v831 = vpop.f32.mrf.mxu0
    %v832 = vadd.f32 0.0, %v831
    %833 = vmatmul.f32.gmra.mxu0 %v811
    %v834 = vpop.f32.mrf.mxu0
    %v835 = vadd.f32 0.0, %v834
    %836 = vdwg.mxu0
    %837 = vxpose.xlu0.b32.start [1/16] %v832, 128
    %838 = vxpose.xlu0.b32.cont [2/16] %v835, 128
    %839 = vxpose.xlu0.b32.cont [3/16] 0.0, 128
    %840 = vxpose.xlu0.b32.cont [4/16] 0.0, 128
    %841 = vxpose.xlu0.b32.cont [5/16] 0.0, 128
    %842 = vxpose.xlu0.b32.cont [6/16] 0.0, 128
    %843 = vxpose.xlu0.b32.cont [7/16] 0.0, 128
    %844 = vxpose.xlu0.b32.cont [8/16] 0.0, 128
    %845 = vxpose.xlu0.b32.cont [9/16] 0.0, 128
    %846 = vxpose.xlu0.b32.cont [10/16] 0.0, 128
    %847 = vxpose.xlu0.b32.cont [11/16] 0.0, 128
    %848 = vxpose.xlu0.b32.cont [12/16] 0.0, 128
    %849 = vxpose.xlu0.b32.cont [13/16] 0.0, 128
    %850 = vxpose.xlu0.b32.cont [14/16] 0.0, 128
    %851 = vxpose.xlu0.b32.cont [15/16] 0.0, 128
    %852 = vxpose.xlu0.b32.end [16/16] 0.0, 128
    %v853 = vpop.trf.xlu0
    %v854 = vpop.trf.xlu0
    %v855 = vpop.trf.xlu0
    %v856 = vpop.trf.xlu0
    %v857 = vpop.trf.xlu0
    %v858 = vpop.trf.xlu0
    %v859 = vpop.trf.xlu0
    %v860 = vpop.trf.xlu0
    %v861 = vpop.trf.xlu0
    %v862 = vpop.trf.xlu0
    %v863 = vpop.trf.xlu0
    %v864 = vpop.trf.xlu0
    %v865 = vpop.trf.xlu0
    %v866 = vpop.trf.xlu0
    %v867 = vpop.trf.xlu0
    %v868 = vpop.trf.xlu0
    %vm869 = vcmask 130048
    %870 = vst.msk [vmem:[#allocation2] sm:$0xff] %vm869, %v853
    // Predicated region
    $region26: #{tpu_custom_call.1} parent=1 // pred_check
      _
    $region27: #{tpu_custom_call.1} parent=1 // pred_check_branch
      %872 = sbr.rel (0) target = $region29
    $region28: #{tpu_custom_call.1} parent=1 // pred_region
      %874 = vsyncadd [#allocation3], 0
      %s876 = sshll.u32 [#allocation2], 4
      %s877 = int_to_ptr.vmem [resolvable:$true] %s876
      %s878 = sshll.u32 %s6, 4
      %s879 = int_to_ptr.hbm [resolvable:$true] %s878
      %881 = dma.vmem_to_hbm [thread:$0]  %s877, 128, %s879, [#allocation3]
    $region29: #{tpu_custom_call.1} parent=1 // pred_fallthru
      _
    // Predicated region
    $region30: #{tpu_custom_call.1} parent=1 // pred_check
      _
    $region31: #{tpu_custom_call.1} parent=1 // pred_check_branch
      %883 = sbr.rel (0) target = $region33
    $region32: #{tpu_custom_call.1} parent=1 // pred_region
      %885 = dma.done [#allocation3], 128
    $region33: #{tpu_custom_call.1} parent=1 // pred_fallthru
      _
    %886 = vsyncpa [#allocation3], 1

</llo_original>
